<compile_context>
chip_gen: v6e
topology: v6e:2x2x1
jax: 0.10.0
libtpu: 0.0.40
codegen_flags: <defaults>
</compile_context>

<pallas_src>
import functools

import jax
import jax.numpy as jnp
from jax import lax
from jax.experimental import pallas as pl
from jax.experimental.pallas import tpu as pltpu

_SUBLANE = 8
_LANE = 128


def _cdiv(a, b):
    return -(-a // b)


def _round_up(x, m):
    return _cdiv(x, m) * m


def _tpu_defaults():
    """Returns (per-buffer tile budget in bytes, chip has >1 TensorCore)."""
    kind = ""
    try:
        kind = jax.devices()[0].device_kind.lower()
    except Exception:
        pass
    is_v5e = ("v5e" in kind) or ("v5 lite" in kind) or ("v5litepod" in kind)
    multicore = (
        ("v7" in kind)
        or ("v4" in kind)
        or ("v5p" in kind)
        or ("v5" in kind and not is_v5e)
    )
    if "v7" in kind:
        return 8 << 20, multicore  # 3.2 TB/s HBM: large steps amortize overhead
    if "v6" in kind:
        return 6 << 20, multicore  # 2x6 MiB double-buffered < 32 MiB scoped default
    return 4 << 20, multicore      # v5e & fallback: 2x4 MiB <= 16 MiB scoped default


def _gap_relu_kernel(x_ref, o_ref, acc_ref, *, inv_hw, hw_rem):
    """One (row_block, hw_block) grid step of global-avg-pool + ReLU."""
    k = pl.program_id(1)
    nk = pl.num_programs(1)

    @pl.when(k == 0)
    def _():
        acc_ref[...] = jnp.zeros_like(acc_ref)

    x = x_ref[...].astype(jnp.float32)

    if hw_rem:
        # HW does not divide the block width: the last hw block overhangs the
        # array, so its tail lanes hold unspecified data -- mask them out.
        @pl.when(k == nk - 1)
        def _():
            col = lax.broadcasted_iota(jnp.int32, x.shape, dimension=1)
            acc_ref[...] += jnp.sum(
                jnp.where(col < hw_rem, x, 0.0), axis=-1, keepdims=True
            )

        @pl.when(k != nk - 1)
        def _():
            acc_ref[...] += jnp.sum(x, axis=-1, keepdims=True)
    else:
        acc_ref[...] += jnp.sum(x, axis=-1, keepdims=True)

    @pl.when(k == nk - 1)
    def _():
        mean = acc_ref[...] * inv_hw
        o_ref[...] = jnp.maximum(mean, 0.0).astype(o_ref.dtype)


def adaptive_avgpool2d_relu(x, *, tile_budget_bytes=None):
    """AdaptiveAvgPool2d(1) followed by ReLU; NCHW in -> (N, C, 1, 1) out."""
    n, c, h, w = x.shape
    rows = n * c
    hw = h * w
    dtype = x.dtype
    itemsize = jnp.dtype(dtype).itemsize
    # Sublane granule is dtype-aware: 8 rows (f32), 16 (bf16), 32 (int8/fp8).
    granule = max(_SUBLANE, 32 // itemsize)

    budget, multicore = _tpu_defaults()
    if tile_budget_bytes is not None:
        budget = tile_budget_bytes

    # VMEM footprint is lane-padded: budget against round_up(width, 128).
    row_bytes = _round_up(hw, _LANE) * itemsize

    if granule * row_bytes <= budget:
        # Whole HW fits one step: single reduction step, tile the rows axis.
        thw = hw                                  # full-dim block: no HW padding
        tr_cap = max(granule, (budget // row_bytes) // granule * granule)
        if rows <= tr_cap:
            tr = rows                             # full-dim block: no row padding
            if multicore and rows >= 2 * granule:
                # Keep >=2 blocks on the "parallel" rows axis so both
                # TensorCores of a megacore chip get work.
                tr = _round_up(_cdiv(rows, 2), granule)
        else:
            tr = tr_cap
    else:
        # HW is large: tile it in 128-lane multiples and accumulate over k.
        thw = max(_LANE, (budget // (granule * itemsize)) // _LANE * _LANE)
        tr = rows if rows <= granule else granule
    # TODO(synk): when rows < 2*granule on a multi-TensorCore chip, split HW
    # into per-core partial sums combined in the wrapper to engage both cores.

    n_row_blocks = _cdiv(rows, tr)
    n_hw_blocks = _cdiv(hw, thw)
    rows_p = n_row_blocks * tr                    # pad only the tiny output
    hw_rem = hw - (n_hw_blocks - 1) * thw
    if hw_rem == thw:
        hw_rem = 0                                # HW divides evenly: no masking

    x2 = x.reshape(rows, hw)                      # no pad, no extra HBM pass

    kernel = functools.partial(_gap_relu_kernel, inv_hw=1.0 / hw, hw_rem=hw_rem)

    out2 = pl.pallas_call(
        kernel,
        out_shape=jax.ShapeDtypeStruct((rows_p, 1), dtype),
        grid_spec=pltpu.PrefetchScalarGridSpec(
            num_scalar_prefetch=0,
            grid=(n_row_blocks, n_hw_blocks),
            in_specs=[pl.BlockSpec((tr, thw), lambda i, k: (i, k))],
            out_specs=pl.BlockSpec((tr, 1), lambda i, k: (i, 0)),
            scratch_shapes=[pltpu.VMEM((tr, 1), jnp.float32)],
        ),
        compiler_params=pltpu.CompilerParams(
            dimension_semantics=("parallel", "arbitrary"),
            vmem_limit_bytes=32 * 1024 * 1024,
        ),
        cost_estimate=pl.CostEstimate(
            flops=rows * hw + rows,
            transcendentals=0,
            bytes_accessed=rows * hw * itemsize + rows * itemsize,
        ),
    )(x2)

    return out2[:rows].reshape(n, c, 1, 1)


def _ref(x):
    return jnp.maximum(jnp.mean(x, axis=(2, 3), keepdims=True), 0.0)


if __name__ == "__main__":
    key = jax.random.PRNGKey(0)
    k0, k1 = jax.random.split(key)

    # Primary small shape consistent with the module (original: (1,3,256,256)).
    x = jax.random.normal(k0, (2, 4, 16, 16), dtype=jnp.float32)
    out = jax.block_until_ready(adaptive_avgpool2d_relu(x))
    assert out.shape == (2, 4, 1, 1), out.shape
    assert jnp.allclose(out, _ref(x), atol=1e-5, rtol=1e-4), "mismatch (main path)"

    # Exercise the HW-tiled + masked-tail path and the row-overhang path by
    # forcing a tiny tile budget (hw = 324 is not a multiple of 128; 12 rows
    # don't divide the 8-row tile).
    y = jax.random.normal(k1, (1, 12, 18, 18), dtype=jnp.float32)
    out_y = jax.block_until_ready(
        adaptive_avgpool2d_relu(y, tile_budget_bytes=8 * 1024)
    )
    assert out_y.shape == (1, 12, 1, 1), out_y.shape
    assert jnp.allclose(out_y, _ref(y), atol=1e-5, rtol=1e-4), "mismatch (tiled path)"

    print("KERNEL_OK")
</pallas_src>

<mosaic_0001>
module attributes {stable_mosaic.version = 11 : i64} {
  func.func @_gap_relu_kernel(%arg0: i32, %arg1: i32, %arg2: memref<8x256xf32, #tpu.memory_space<vmem>>, %arg3: memref<8x1xf32, #tpu.memory_space<vmem>>, %arg4: memref<8x1xf32, #tpu.memory_space<vmem>>) attributes {dimension_semantics = [#tpu.dimension_semantics<parallel>, #tpu.dimension_semantics<arbitrary>], iteration_bounds = array<i64: 1, 1>, scalar_prefetch = 0 : i64, scratch_operands = 1 : i64, tpu.core_type = #tpu.core_type<tc>, window_params = [{transform_indices = @transform_0, window_bounds = array<i64: 8, 256>}, {transform_indices = @transform_1, window_bounds = array<i64: 8, 1>}]} {
    %c0_i32 = arith.constant 0 : i32
    %0 = arith.cmpi eq, %arg1, %c0_i32 : i32
    %1 = arith.extui %0 : i1 to i32
    %c0_i32_0 = arith.constant 0 : i32
    %2 = arith.cmpi ne, %1, %c0_i32_0 : i32
    scf.if %2 {
      %cst_8 = arith.constant 0.000000e+00 : f32
      %12 = vector.broadcast %cst_8 : f32 to vector<8x1xf32>
      %c0_9 = arith.constant 0 : index
      %c0_10 = arith.constant 0 : index
      %13 = vector.load %arg4[%c0_9, %c0_10] : memref<8x1xf32, #tpu.memory_space<vmem>>, vector<8x1xf32>
      tpu.vector_store %arg4[%c0_9, %c0_10], %12 {strides = array<i32>} : memref<8x1xf32, #tpu.memory_space<vmem>>, vector<8x1xf32>,
    } else {
    }
    %c0 = arith.constant 0 : index
    %c0_1 = arith.constant 0 : index
    %3 = vector.load %arg2[%c0, %c0_1] : memref<8x256xf32, #tpu.memory_space<vmem>>, vector<8x256xf32>
    %c0_2 = arith.constant 0 : index
    %c0_3 = arith.constant 0 : index
    %4 = vector.load %arg4[%c0_2, %c0_3] : memref<8x1xf32, #tpu.memory_space<vmem>>, vector<8x1xf32>
    %cst = arith.constant dense<0.000000e+00> : vector<8xf32>
    %5 = vector.multi_reduction <add>, %3, %cst [1] : vector<8x256xf32> to vector<8xf32>
    %6 = vector.shape_cast %5 : vector<8xf32> to vector<8x1xf32>
    %7 = arith.addf %4, %6 : vector<8x1xf32>
    %c0_4 = arith.constant 0 : index
    %c0_5 = arith.constant 0 : index
    %8 = vector.load %arg4[%c0_4, %c0_5] : memref<8x1xf32, #tpu.memory_space<vmem>>, vector<8x1xf32>
    tpu.vector_store %arg4[%c0_4, %c0_5], %7 {strides = array<i32>} : memref<8x1xf32, #tpu.memory_space<vmem>>, vector<8x1xf32>,
    %c0_i32_6 = arith.constant 0 : i32
    %9 = arith.cmpi eq, %arg1, %c0_i32_6 : i32
    %10 = arith.extui %9 : i1 to i32
    %c0_i32_7 = arith.constant 0 : i32
    %11 = arith.cmpi ne, %10, %c0_i32_7 : i32
    scf.if %11 {
      %c0_8 = arith.constant 0 : index
      %c0_9 = arith.constant 0 : index
      %12 = vector.load %arg4[%c0_8, %c0_9] : memref<8x1xf32, #tpu.memory_space<vmem>>, vector<8x1xf32>
      %cst_10 = arith.constant 3.906250e-03 : f32
      %13 = vector.broadcast %cst_10 : f32 to vector<8x1xf32>
      %14 = arith.mulf %12, %13 : vector<8x1xf32>
      %cst_11 = arith.constant 0.000000e+00 : f32
      %15 = vector.broadcast %cst_11 : f32 to vector<8x1xf32>
      %16 = arith.maximumf %14, %15 : vector<8x1xf32>
      %c0_12 = arith.constant 0 : index
      %c0_13 = arith.constant 0 : index
      %17 = vector.load %arg3[%c0_12, %c0_13] : memref<8x1xf32, #tpu.memory_space<vmem>>, vector<8x1xf32>
      tpu.vector_store %arg3[%c0_12, %c0_13], %16 {strides = array<i32>} : memref<8x1xf32, #tpu.memory_space<vmem>>, vector<8x1xf32>,
    } else {
    }
    return
  }
  func.func @transform_0(%arg0: i32, %arg1: i32) -> (i32, i32) {
    %c0_i32 = arith.constant 0 : i32
    return %arg0, %arg1 : i32, i32
  }
  func.func @transform_1(%arg0: i32, %arg1: i32) -> (i32, i32) {
    %c0_i32 = arith.constant 0 : i32
    %c0_i32_0 = arith.constant 0 : i32
    return %arg0, %c0_i32 : i32, i32
  }
}

</mosaic_0001>

<llo_original>
// kernel: tpu_custom_call.1
$region0: #{tpu_custom_call.1}
  #allocation0 [shape = 'u32[]', space=smem, size = 0x4, offset = 0x4, fixed_abs, tag = 'smem constant byte address 0x4 - core index']
  #allocation1 [shape = 'u32[144,128]{1,0:T(1,128)}', space=vmem, size = 0x12000, scoped, tag = 'internal scratch']
  #allocation2 [shape = 'f32[8,1]{1,0:T(8,128)}', space=vmem, size = 0x1000, scoped, tag = 'scratch operand']
  %s0 = inlined_call_operand.hbm [shape: f32[8,256], index: 0, kind: input, shape index: {}]
  %s1 = inlined_call_operand.vmem [shape: f32[8,1], index: 1, kind: output, shape index: {}]
  %s2 = sld [smem:[#allocation0]]
  $region26: #{tpu_custom_call.1} parent=0
    _
  %s4 = ssub.s32 1, %s2
  %s5 = scalar_select 0, %s4, %s2
  $region1: #{tpu_custom_call.1} parent=0
    #allocation3 [shape = 'u8[8192]{0}', space=vmem, size = 0x2000, scoped, tag = 'input window, operand 0, single buffered']
    #allocation4 [shape = 's32[1]{0}', space=sflag, size = 0x4, scoped, tag = 'scoped memory for tpu_custom_call.1']
    %6 = vsyncpa [#allocation4], 0
    // Predicated region
    $region2: #{tpu_custom_call.1} parent=1 // pred_check
      _
    $region3: #{tpu_custom_call.1} parent=1 // pred_check_branch
      %8 = sbr.rel (0) target = $region5
    $region4: #{tpu_custom_call.1} parent=1 // pred_region
      %s10 = ssub.s32 256, 256
      %11 = vsyncadd [#allocation4], %s10
      %s13 = sshll.u32 [#allocation3], 4
      %s14 = int_to_ptr.vmem [resolvable:$true] %s13
      %16 = dma.hbm_to_vmem [thread:$0]  %s0, 256, %s14, [#allocation4]
    $region5: #{tpu_custom_call.1} parent=1 // pred_fallthru
      _
    // Predicated region
    $region6: #{tpu_custom_call.1} parent=1 // pred_check
      _
    $region7: #{tpu_custom_call.1} parent=1 // pred_check_branch
      %18 = sbr.rel (0) target = $region9
    $region8: #{tpu_custom_call.1} parent=1 // pred_region
      %19 = dma.done [#allocation4], 256
    $region9: #{tpu_custom_call.1} parent=1 // pred_fallthru
      _
    %p20 = scmp.eq.s32.totalorder 0, 0
    // Predicated region
    $region10: #{tpu_custom_call.1} parent=1 // pred_check
      %p21 = pneg %p20
    $region11: #{tpu_custom_call.1} parent=1 // pred_check_branch
      %23 = sbr.rel (%p21) target = $region13
    $region12: #{tpu_custom_call.1} parent=1 // pred_region
      %vm24 = vcmask 7168
      %25 = vst.msk [vmem:[#allocation2] sm:$0xff] %vm24, 0.0
    $region13: #{tpu_custom_call.1} parent=1 // pred_fallthru
      _
    %v26 = vld [vmem:[#allocation3] sm:$0xff]
    %v27 = vld [vmem:[#allocation3 + $0x8] sm:$0xff]
    %v28 = vld [vmem:[#allocation2] sm:$0xff]
    %v29 = vadd.f32 %v26, %v27
    %30 = vadd.xlane.f32.xlu0 %v29
    %v31 = vpop.xlane.xlu0 %30
    %v32 = vadd.f32 %v28, %v31
    %vm33 = vcmask 7168
    %34 = vst.msk [vmem:[#allocation2] sm:$0xff] %vm33, %v32
    // Predicated region
    $region14: #{tpu_custom_call.1} parent=1 // pred_check
      %p35 = pneg %p20
    $region15: #{tpu_custom_call.1} parent=1 // pred_check_branch
      %37 = sbr.rel (%p35) target = $region17
    $region16: #{tpu_custom_call.1} parent=1 // pred_region
      %v38 = vld [vmem:[#allocation2] sm:$0xff]
      %v39 = vmul.f32 %v38, 0.00390625
      %v40 = vmax.f32 %v39, 0.0
      %41 = vst.msk [vmem:[%s1] sm:$0xff] %vm33, %v40
    $region17: #{tpu_custom_call.1} parent=1 // pred_fallthru
      _
    // Predicated region
    $region18: #{tpu_custom_call.1} parent=1 // pred_check
      _
    $region19: #{tpu_custom_call.1} parent=1 // pred_check_branch
      %43 = sbr.rel (0) target = $region21
    $region20: #{tpu_custom_call.1} parent=1 // pred_region
      _
    $region21: #{tpu_custom_call.1} parent=1 // pred_fallthru
      _
    // Predicated region
    $region22: #{tpu_custom_call.1} parent=1 // pred_check
      _
    $region23: #{tpu_custom_call.1} parent=1 // pred_check_branch
      %45 = sbr.rel (0) target = $region25
    $region24: #{tpu_custom_call.1} parent=1 // pred_region
      _
    $region25: #{tpu_custom_call.1} parent=1 // pred_fallthru
      _
    %46 = vsyncpa [#allocation4], 1

</llo_original>
